<compile_context>
chip_gen: v7x
topology: tpu7x:2x2x1
jax: 0.10.0
libtpu: 0.0.40
codegen_flags: <defaults>
</compile_context>

<pallas_src>
import math

import jax
import jax.numpy as jnp
from jax.experimental import pallas as pl
from jax.experimental.pallas import tpu as pltpu

INPUT_DIM = 64
PADDED_INPUT_DIM = 128   # zero-padded K for the first matmul (lane-full)
HIDDEN_DIM = 128
NUM_BLOCKS = 3
LN_EPS = 1e-5
DEFAULT_TILE_B = 256     # batch tile; sweep 256-1024 on big batches (>=2 grid steps on v7x)


def _round_up(n, m):
    return ((n + m - 1) // m) * m


def _exec_decision_kernel(x_ref, w0_ref, b0_ref, wh_ref, bh_ref, g_ref, beta_ref,
                          wout_ref, bout_ref, o_ref):
    x = x_ref[...]  # (TILE_B, 128) f32; input features zero-padded 64->128

    # Input projection + ReLU
    h = jnp.dot(x, w0_ref[...], preferred_element_type=jnp.float32) + b0_ref[...]
    h = jnp.maximum(h, 0.0)

    inv_d = jnp.float32(1.0 / HIDDEN_DIM)

    # 3 residual blocks: Linear -> ReLU -> (Dropout: identity in eval) -> LayerNorm, + residual
    # TODO(synk): stochastic Dropout(p=0.3) (training mode) not implemented; eval-mode identity used.
    for i in range(NUM_BLOCKS):
        residual = h
        z = jnp.dot(h, wh_ref[i], preferred_element_type=jnp.float32) + bh_ref[i]
        z = jnp.maximum(z, 0.0)
        # One-pass LayerNorm statistics: var = E[z^2] - mean^2
        mean = jnp.sum(z, axis=-1, keepdims=True) * inv_d
        meansq = jnp.sum(z * z, axis=-1, keepdims=True) * inv_d
        var = meansq - mean * mean
        z = (z - mean) * jax.lax.rsqrt(var + LN_EPS)
        z = z * g_ref[i] + beta_ref[i]
        h = z + residual

    # Lane-dense output head: contract the 128-feature axis of Wout^T (1,128) and h
    # (TILE_B,128) -> (1, TILE_B) tile, so the store is a full-lane vst.
    logit = jax.lax.dot_general(
        wout_ref[...], h,
        dimension_numbers=(((1,), (1,)), ((), ())),
        preferred_element_type=jnp.float32,
    ) + bout_ref[...]
    o_ref[...] = jax.nn.sigmoid(logit)


def execution_decision_forward(x, params, tile_b=DEFAULT_TILE_B):
    """x: (B, INPUT_DIM) float32 -> (B, 1) float32 probabilities."""
    B, in_dim = x.shape
    assert in_dim == INPUT_DIM
    w0, b0, wh, bh, gamma, beta, wout_t, bout = params

    # Pick the batch tile and zero-pad the batch so it divides evenly.
    padded_b = _round_up(B, 8)
    tile = min(tile_b, padded_b)            # tile is either padded_b or a multiple of 128
    padded_b = _round_up(padded_b, tile)
    if padded_b != B:
        x = jnp.pad(x, ((0, padded_b - B), (0, 0)))
    # Zero-pad input features 64 -> 128 (W0 is stored padded already).
    x = jnp.pad(x, ((0, 0), (0, PADDED_INPUT_DIM - INPUT_DIM)))
    num_tiles = padded_b // tile

    # Grid-invariant operands (constant index_map -> not re-DMA'd across steps).
    full = lambda shape: pl.BlockSpec(shape, lambda i: tuple(0 for _ in shape))

    out = pl.pallas_call(
        _exec_decision_kernel,
        out_shape=jax.ShapeDtypeStruct((1, padded_b), jnp.float32),
        grid_spec=pltpu.PrefetchScalarGridSpec(
            num_scalar_prefetch=0,
            grid=(num_tiles,),
            in_specs=[
                pl.BlockSpec((tile, PADDED_INPUT_DIM), lambda i: (i, 0)),  # x
                full((PADDED_INPUT_DIM, HIDDEN_DIM)),                      # W0 (padded rows = 0)
                full((1, HIDDEN_DIM)),                                     # b0
                full((NUM_BLOCKS, HIDDEN_DIM, HIDDEN_DIM)),                # hidden weights
                full((NUM_BLOCKS, 1, HIDDEN_DIM)),                         # hidden biases
                full((NUM_BLOCKS, 1, HIDDEN_DIM)),                         # LN gamma
                full((NUM_BLOCKS, 1, HIDDEN_DIM)),                         # LN beta
                full((1, HIDDEN_DIM)),                                     # W_out^T (lane-dense)
                full((1, 1)),                                              # b_out
            ],
            out_specs=pl.BlockSpec((1, tile), lambda i: (0, i)),           # lane-dense output
        ),
        compiler_params=pltpu.CompilerParams(dimension_semantics=("parallel",)),
    )(x, w0, b0, wh, bh, gamma, beta, wout_t, bout)

    # (1, padded_b) -> (padded_b, 1) -> drop padded rows.
    return out.reshape(padded_b, 1)[:B]


def init_params(key):
    """Deterministic xavier-uniform weights / zero biases, matching the module's init."""
    ks = jax.random.split(key, NUM_BLOCKS + 2)

    def xavier(k, fan_in, fan_out, shape):
        bound = math.sqrt(6.0 / (fan_in + fan_out))
        return jax.random.uniform(k, shape, jnp.float32, minval=-bound, maxval=bound)

    w0 = xavier(ks[0], INPUT_DIM, HIDDEN_DIM, (INPUT_DIM, HIDDEN_DIM))
    w0 = jnp.pad(w0, ((0, PADDED_INPUT_DIM - INPUT_DIM), (0, 0)))  # padded K rows are zero
    b0 = jnp.zeros((1, HIDDEN_DIM), jnp.float32)
    wh = jnp.stack([xavier(ks[1 + i], HIDDEN_DIM, HIDDEN_DIM, (HIDDEN_DIM, HIDDEN_DIM))
                    for i in range(NUM_BLOCKS)])
    bh = jnp.zeros((NUM_BLOCKS, 1, HIDDEN_DIM), jnp.float32)
    gamma = jnp.ones((NUM_BLOCKS, 1, HIDDEN_DIM), jnp.float32)   # LayerNorm weight init = 1
    beta = jnp.zeros((NUM_BLOCKS, 1, HIDDEN_DIM), jnp.float32)   # LayerNorm bias init = 0
    wout_t = xavier(ks[-1], HIDDEN_DIM, 1, (1, HIDDEN_DIM))      # stored transposed (1, 128)
    bout = jnp.zeros((1, 1), jnp.float32)
    return (w0, b0, wh, bh, gamma, beta, wout_t, bout)


def _reference_forward(x, params):
    """Pure-JAX reference (two-pass LayerNorm, unpadded weights)."""
    w0, b0, wh, bh, gamma, beta, wout_t, bout = params
    w0_u = w0[:INPUT_DIM, :]
    h = jnp.maximum(x @ w0_u + b0, 0.0)
    for i in range(NUM_BLOCKS):
        r = h
        z = jnp.maximum(h @ wh[i] + bh[i], 0.0)
        mean = jnp.mean(z, axis=-1, keepdims=True)
        var = jnp.mean((z - mean) ** 2, axis=-1, keepdims=True)
        z = (z - mean) * jax.lax.rsqrt(var + LN_EPS) * gamma[i] + beta[i]
        h = z + r
    return jax.nn.sigmoid(h @ wout_t.T + bout)


if __name__ == "__main__":
    key = jax.random.PRNGKey(0)
    k_x, k_x2, k_p = jax.random.split(key, 3)
    params = init_params(k_p)

    # Small batch: single grid step, tile == padded batch.
    x_small = jax.random.normal(k_x, (16, INPUT_DIM), jnp.float32)
    out_small = jax.block_until_ready(execution_decision_forward(x_small, params))
    ref_small = _reference_forward(x_small, params)
    assert out_small.shape == (16, 1)
    assert jnp.allclose(out_small, ref_small, atol=1e-4, rtol=1e-4), "mismatch vs reference (small)"

    # Ragged batch: exercises zero-padding and a 2-step (parallel) grid at TILE_B=256.
    x_big = jax.random.normal(k_x2, (300, INPUT_DIM), jnp.float32)
    out_big = jax.block_until_ready(execution_decision_forward(x_big, params))
    ref_big = _reference_forward(x_big, params)
    assert out_big.shape == (300, 1)
    assert jnp.allclose(out_big, ref_big, atol=1e-4, rtol=1e-4), "mismatch vs reference (big)"

    print("KERNEL_OK")
</pallas_src>

<mosaic_0001>
module attributes {stable_mosaic.version = 11 : i64} {
  func.func @_exec_decision_kernel(%arg0: i32, %arg1: memref<16x128xf32, #tpu.memory_space<vmem>>, %arg2: memref<128x128xf32, #tpu.memory_space<vmem>>, %arg3: memref<1x128xf32, #tpu.memory_space<vmem>>, %arg4: memref<3x128x128xf32, #tpu.memory_space<vmem>>, %arg5: memref<3x1x128xf32, #tpu.memory_space<vmem>>, %arg6: memref<3x1x128xf32, #tpu.memory_space<vmem>>, %arg7: memref<3x1x128xf32, #tpu.memory_space<vmem>>, %arg8: memref<1x128xf32, #tpu.memory_space<vmem>>, %arg9: memref<1x1xf32, #tpu.memory_space<vmem>>, %arg10: memref<1x16xf32, #tpu.memory_space<vmem>>) attributes {dimension_semantics = [#tpu.dimension_semantics<parallel>], iteration_bounds = array<i64: 1>, scalar_prefetch = 0 : i64, scratch_operands = 0 : i64, tpu.core_type = #tpu.core_type<tc>, window_params = [{transform_indices = @transform_0, window_bounds = array<i64: 16, 128>}, {pipeline_mode = #tpu.pipeline_mode<synchronous>, transform_indices = @transform_1, window_bounds = array<i64: 128, 128>}, {pipeline_mode = #tpu.pipeline_mode<synchronous>, transform_indices = @transform_2, window_bounds = array<i64: 1, 128>}, {pipeline_mode = #tpu.pipeline_mode<synchronous>, transform_indices = @transform_3, window_bounds = array<i64: 3, 128, 128>}, {pipeline_mode = #tpu.pipeline_mode<synchronous>, transform_indices = @transform_4, window_bounds = array<i64: 3, 1, 128>}, {pipeline_mode = #tpu.pipeline_mode<synchronous>, transform_indices = @transform_5, window_bounds = array<i64: 3, 1, 128>}, {pipeline_mode = #tpu.pipeline_mode<synchronous>, transform_indices = @transform_6, window_bounds = array<i64: 3, 1, 128>}, {pipeline_mode = #tpu.pipeline_mode<synchronous>, transform_indices = @transform_7, window_bounds = array<i64: 1, 128>}, {pipeline_mode = #tpu.pipeline_mode<synchronous>, transform_indices = @transform_8, window_bounds = array<i64: 1, 1>}, {transform_indices = @transform_9, window_bounds = array<i64: 1, 16>}]} {
    %c0 = arith.constant 0 : index
    %c0_0 = arith.constant 0 : index
    %0 = vector.load %arg1[%c0, %c0_0] : memref<16x128xf32, #tpu.memory_space<vmem>>, vector<16x128xf32>
    %c0_1 = arith.constant 0 : index
    %c0_2 = arith.constant 0 : index
    %1 = vector.load %arg2[%c0_1, %c0_2] : memref<128x128xf32, #tpu.memory_space<vmem>>, vector<128x128xf32>
    %cst = arith.constant dense<0.000000e+00> : vector<16x128xf32>
    %2 = tpu.matmul %0, %1, %cst {dimension_numbers = #tpu.dot_dimension_numbers<[1], [0], [0], [1], [0, 0, 1, 1], [], []>} : vector<16x128xf32>, vector<128x128xf32>, vector<16x128xf32> -> vector<16x128xf32>
    %c0_3 = arith.constant 0 : index
    %c0_4 = arith.constant 0 : index
    %3 = vector.load %arg3[%c0_3, %c0_4] : memref<1x128xf32, #tpu.memory_space<vmem>>, vector<1x128xf32>
    %4 = vector.broadcast %3 : vector<1x128xf32> to vector<16x128xf32>
    %5 = arith.addf %2, %4 : vector<16x128xf32>
    %cst_5 = arith.constant 0.000000e+00 : f32
    %6 = vector.broadcast %cst_5 : f32 to vector<16x128xf32>
    %7 = arith.maximumf %5, %6 : vector<16x128xf32>
    %c0_6 = arith.constant 0 : index
    %c0_7 = arith.constant 0 : index
    %c0_8 = arith.constant 0 : index
    %8 = vector.load %arg4[%c0_6, %c0_7, %c0_8] : memref<3x128x128xf32, #tpu.memory_space<vmem>>, vector<1x128x128xf32>
    %9 = vector.shape_cast %8 : vector<1x128x128xf32> to vector<128x128xf32>
    %cst_9 = arith.constant dense<0.000000e+00> : vector<16x128xf32>
    %10 = tpu.matmul %7, %9, %cst_9 {dimension_numbers = #tpu.dot_dimension_numbers<[1], [0], [0], [1], [0, 0, 1, 1], [], []>} : vector<16x128xf32>, vector<128x128xf32>, vector<16x128xf32> -> vector<16x128xf32>
    %c0_10 = arith.constant 0 : index
    %c0_11 = arith.constant 0 : index
    %c0_12 = arith.constant 0 : index
    %11 = vector.load %arg5[%c0_10, %c0_11, %c0_12] : memref<3x1x128xf32, #tpu.memory_space<vmem>>, vector<1x1x128xf32>
    %12 = vector.shape_cast %11 : vector<1x1x128xf32> to vector<1x128xf32>
    %13 = vector.broadcast %12 : vector<1x128xf32> to vector<16x128xf32>
    %14 = arith.addf %10, %13 : vector<16x128xf32>
    %cst_13 = arith.constant 0.000000e+00 : f32
    %15 = vector.broadcast %cst_13 : f32 to vector<16x128xf32>
    %16 = arith.maximumf %14, %15 : vector<16x128xf32>
    %cst_14 = arith.constant dense<0.000000e+00> : vector<16xf32>
    %17 = vector.multi_reduction <add>, %16, %cst_14 [1] : vector<16x128xf32> to vector<16xf32>
    %18 = vector.shape_cast %17 : vector<16xf32> to vector<16x1xf32>
    %cst_15 = arith.constant 7.812500e-03 : f32
    %19 = vector.broadcast %cst_15 : f32 to vector<16x1xf32>
    %20 = arith.mulf %18, %19 : vector<16x1xf32>
    %21 = arith.mulf %16, %16 : vector<16x128xf32>
    %cst_16 = arith.constant dense<0.000000e+00> : vector<16xf32>
    %22 = vector.multi_reduction <add>, %21, %cst_16 [1] : vector<16x128xf32> to vector<16xf32>
    %23 = vector.shape_cast %22 : vector<16xf32> to vector<16x1xf32>
    %cst_17 = arith.constant 7.812500e-03 : f32
    %24 = vector.broadcast %cst_17 : f32 to vector<16x1xf32>
    %25 = arith.mulf %23, %24 : vector<16x1xf32>
    %26 = arith.mulf %20, %20 : vector<16x1xf32>
    %27 = arith.subf %25, %26 : vector<16x1xf32>
    %28 = vector.broadcast %20 : vector<16x1xf32> to vector<16x128xf32>
    %29 = arith.subf %16, %28 : vector<16x128xf32>
    %cst_18 = arith.constant 9.99999974E-6 : f32
    %30 = vector.broadcast %cst_18 : f32 to vector<16x1xf32>
    %31 = arith.addf %27, %30 : vector<16x1xf32>
    %32 = math.rsqrt %31 : vector<16x1xf32>
    %33 = vector.broadcast %32 : vector<16x1xf32> to vector<16x128xf32>
    %34 = arith.mulf %29, %33 : vector<16x128xf32>
    %c0_19 = arith.constant 0 : index
    %c0_20 = arith.constant 0 : index
    %c0_21 = arith.constant 0 : index
    %35 = vector.load %arg6[%c0_19, %c0_20, %c0_21] : memref<3x1x128xf32, #tpu.memory_space<vmem>>, vector<1x1x128xf32>
    %36 = vector.shape_cast %35 : vector<1x1x128xf32> to vector<1x128xf32>
    %37 = vector.broadcast %36 : vector<1x128xf32> to vector<16x128xf32>
    %38 = arith.mulf %34, %37 : vector<16x128xf32>
    %c0_22 = arith.constant 0 : index
    %c0_23 = arith.constant 0 : index
    %c0_24 = arith.constant 0 : index
    %39 = vector.load %arg7[%c0_22, %c0_23, %c0_24] : memref<3x1x128xf32, #tpu.memory_space<vmem>>, vector<1x1x128xf32>
    %40 = vector.shape_cast %39 : vector<1x1x128xf32> to vector<1x128xf32>
    %41 = vector.broadcast %40 : vector<1x128xf32> to vector<16x128xf32>
    %42 = arith.addf %38, %41 : vector<16x128xf32>
    %43 = arith.addf %42, %7 : vector<16x128xf32>
    %c1 = arith.constant 1 : index
    %c0_25 = arith.constant 0 : index
    %c0_26 = arith.constant 0 : index
    %44 = vector.load %arg4[%c1, %c0_25, %c0_26] : memref<3x128x128xf32, #tpu.memory_space<vmem>>, vector<1x128x128xf32>
    %45 = vector.shape_cast %44 : vector<1x128x128xf32> to vector<128x128xf32>
    %cst_27 = arith.constant dense<0.000000e+00> : vector<16x128xf32>
    %46 = tpu.matmul %43, %45, %cst_27 {dimension_numbers = #tpu.dot_dimension_numbers<[1], [0], [0], [1], [0, 0, 1, 1], [], []>} : vector<16x128xf32>, vector<128x128xf32>, vector<16x128xf32> -> vector<16x128xf32>
    %c1_28 = arith.constant 1 : index
    %c0_29 = arith.constant 0 : index
    %c0_30 = arith.constant 0 : index
    %47 = vector.load %arg5[%c1_28, %c0_29, %c0_30] : memref<3x1x128xf32, #tpu.memory_space<vmem>>, vector<1x1x128xf32>
    %48 = vector.shape_cast %47 : vector<1x1x128xf32> to vector<1x128xf32>
    %49 = vector.broadcast %48 : vector<1x128xf32> to vector<16x128xf32>
    %50 = arith.addf %46, %49 : vector<16x128xf32>
    %cst_31 = arith.constant 0.000000e+00 : f32
    %51 = vector.broadcast %cst_31 : f32 to vector<16x128xf32>
    %52 = arith.maximumf %50, %51 : vector<16x128xf32>
    %cst_32 = arith.constant dense<0.000000e+00> : vector<16xf32>
    %53 = vector.multi_reduction <add>, %52, %cst_32 [1] : vector<16x128xf32> to vector<16xf32>
    %54 = vector.shape_cast %53 : vector<16xf32> to vector<16x1xf32>
    %cst_33 = arith.constant 7.812500e-03 : f32
    %55 = vector.broadcast %cst_33 : f32 to vector<16x1xf32>
    %56 = arith.mulf %54, %55 : vector<16x1xf32>
    %57 = arith.mulf %52, %52 : vector<16x128xf32>
    %cst_34 = arith.constant dense<0.000000e+00> : vector<16xf32>
    %58 = vector.multi_reduction <add>, %57, %cst_34 [1] : vector<16x128xf32> to vector<16xf32>
    %59 = vector.shape_cast %58 : vector<16xf32> to vector<16x1xf32>
    %cst_35 = arith.constant 7.812500e-03 : f32
    %60 = vector.broadcast %cst_35 : f32 to vector<16x1xf32>
    %61 = arith.mulf %59, %60 : vector<16x1xf32>
    %62 = arith.mulf %56, %56 : vector<16x1xf32>
    %63 = arith.subf %61, %62 : vector<16x1xf32>
    %64 = vector.broadcast %56 : vector<16x1xf32> to vector<16x128xf32>
    %65 = arith.subf %52, %64 : vector<16x128xf32>
    %cst_36 = arith.constant 9.99999974E-6 : f32
    %66 = vector.broadcast %cst_36 : f32 to vector<16x1xf32>
    %67 = arith.addf %63, %66 : vector<16x1xf32>
    %68 = math.rsqrt %67 : vector<16x1xf32>
    %69 = vector.broadcast %68 : vector<16x1xf32> to vector<16x128xf32>
    %70 = arith.mulf %65, %69 : vector<16x128xf32>
    %c1_37 = arith.constant 1 : index
    %c0_38 = arith.constant 0 : index
    %c0_39 = arith.constant 0 : index
    %71 = vector.load %arg6[%c1_37, %c0_38, %c0_39] : memref<3x1x128xf32, #tpu.memory_space<vmem>>, vector<1x1x128xf32>
    %72 = vector.shape_cast %71 : vector<1x1x128xf32> to vector<1x128xf32>
    %73 = vector.broadcast %72 : vector<1x128xf32> to vector<16x128xf32>
    %74 = arith.mulf %70, %73 : vector<16x128xf32>
    %c1_40 = arith.constant 1 : index
    %c0_41 = arith.constant 0 : index
    %c0_42 = arith.constant 0 : index
    %75 = vector.load %arg7[%c1_40, %c0_41, %c0_42] : memref<3x1x128xf32, #tpu.memory_space<vmem>>, vector<1x1x128xf32>
    %76 = vector.shape_cast %75 : vector<1x1x128xf32> to vector<1x128xf32>
    %77 = vector.broadcast %76 : vector<1x128xf32> to vector<16x128xf32>
    %78 = arith.addf %74, %77 : vector<16x128xf32>
    %79 = arith.addf %78, %43 : vector<16x128xf32>
    %c2 = arith.constant 2 : index
    %c0_43 = arith.constant 0 : index
    %c0_44 = arith.constant 0 : index
    %80 = vector.load %arg4[%c2, %c0_43, %c0_44] : memref<3x128x128xf32, #tpu.memory_space<vmem>>, vector<1x128x128xf32>
    %81 = vector.shape_cast %80 : vector<1x128x128xf32> to vector<128x128xf32>
    %cst_45 = arith.constant dense<0.000000e+00> : vector<16x128xf32>
    %82 = tpu.matmul %79, %81, %cst_45 {dimension_numbers = #tpu.dot_dimension_numbers<[1], [0], [0], [1], [0, 0, 1, 1], [], []>} : vector<16x128xf32>, vector<128x128xf32>, vector<16x128xf32> -> vector<16x128xf32>
    %c2_46 = arith.constant 2 : index
    %c0_47 = arith.constant 0 : index
    %c0_48 = arith.constant 0 : index
    %83 = vector.load %arg5[%c2_46, %c0_47, %c0_48] : memref<3x1x128xf32, #tpu.memory_space<vmem>>, vector<1x1x128xf32>
    %84 = vector.shape_cast %83 : vector<1x1x128xf32> to vector<1x128xf32>
    %85 = vector.broadcast %84 : vector<1x128xf32> to vector<16x128xf32>
    %86 = arith.addf %82, %85 : vector<16x128xf32>
    %cst_49 = arith.constant 0.000000e+00 : f32
    %87 = vector.broadcast %cst_49 : f32 to vector<16x128xf32>
    %88 = arith.maximumf %86, %87 : vector<16x128xf32>
    %cst_50 = arith.constant dense<0.000000e+00> : vector<16xf32>
    %89 = vector.multi_reduction <add>, %88, %cst_50 [1] : vector<16x128xf32> to vector<16xf32>
    %90 = vector.shape_cast %89 : vector<16xf32> to vector<16x1xf32>
    %cst_51 = arith.constant 7.812500e-03 : f32
    %91 = vector.broadcast %cst_51 : f32 to vector<16x1xf32>
    %92 = arith.mulf %90, %91 : vector<16x1xf32>
    %93 = arith.mulf %88, %88 : vector<16x128xf32>
    %cst_52 = arith.constant dense<0.000000e+00> : vector<16xf32>
    %94 = vector.multi_reduction <add>, %93, %cst_52 [1] : vector<16x128xf32> to vector<16xf32>
    %95 = vector.shape_cast %94 : vector<16xf32> to vector<16x1xf32>
    %cst_53 = arith.constant 7.812500e-03 : f32
    %96 = vector.broadcast %cst_53 : f32 to vector<16x1xf32>
    %97 = arith.mulf %95, %96 : vector<16x1xf32>
    %98 = arith.mulf %92, %92 : vector<16x1xf32>
    %99 = arith.subf %97, %98 : vector<16x1xf32>
    %100 = vector.broadcast %92 : vector<16x1xf32> to vector<16x128xf32>
    %101 = arith.subf %88, %100 : vector<16x128xf32>
    %cst_54 = arith.constant 9.99999974E-6 : f32
    %102 = vector.broadcast %cst_54 : f32 to vector<16x1xf32>
    %103 = arith.addf %99, %102 : vector<16x1xf32>
    %104 = math.rsqrt %103 : vector<16x1xf32>
    %105 = vector.broadcast %104 : vector<16x1xf32> to vector<16x128xf32>
    %106 = arith.mulf %101, %105 : vector<16x128xf32>
    %c2_55 = arith.constant 2 : index
    %c0_56 = arith.constant 0 : index
    %c0_57 = arith.constant 0 : index
    %107 = vector.load %arg6[%c2_55, %c0_56, %c0_57] : memref<3x1x128xf32, #tpu.memory_space<vmem>>, vector<1x1x128xf32>
    %108 = vector.shape_cast %107 : vector<1x1x128xf32> to vector<1x128xf32>
    %109 = vector.broadcast %108 : vector<1x128xf32> to vector<16x128xf32>
    %110 = arith.mulf %106, %109 : vector<16x128xf32>
    %c2_58 = arith.constant 2 : index
    %c0_59 = arith.constant 0 : index
    %c0_60 = arith.constant 0 : index
    %111 = vector.load %arg7[%c2_58, %c0_59, %c0_60] : memref<3x1x128xf32, #tpu.memory_space<vmem>>, vector<1x1x128xf32>
    %112 = vector.shape_cast %111 : vector<1x1x128xf32> to vector<1x128xf32>
    %113 = vector.broadcast %112 : vector<1x128xf32> to vector<16x128xf32>
    %114 = arith.addf %110, %113 : vector<16x128xf32>
    %115 = arith.addf %114, %79 : vector<16x128xf32>
    %c0_61 = arith.constant 0 : index
    %c0_62 = arith.constant 0 : index
    %116 = vector.load %arg8[%c0_61, %c0_62] : memref<1x128xf32, #tpu.memory_space<vmem>>, vector<1x128xf32>
    %cst_63 = arith.constant dense<0.000000e+00> : vector<1x16xf32>
    %117 = tpu.matmul %116, %115, %cst_63 {dimension_numbers = #tpu.dot_dimension_numbers<[1], [1], [0], [0], [0, 0, 1, 0], [], []>} : vector<1x128xf32>, vector<16x128xf32>, vector<1x16xf32> -> vector<1x16xf32>
    %c0_64 = arith.constant 0 : index
    %c0_65 = arith.constant 0 : index
    %118 = vector.load %arg9[%c0_64, %c0_65] : memref<1x1xf32, #tpu.memory_space<vmem>>, vector<1x1xf32>
    %119 = vector.broadcast %118 : vector<1x1xf32> to vector<1x16xf32>
    %120 = arith.addf %117, %119 : vector<1x16xf32>
    %121 = arith.negf %120 : vector<1x16xf32>
    %122 = math.exp %121 : vector<1x16xf32>
    %cst_66 = arith.constant 1.000000e+00 : f32
    %123 = vector.broadcast %cst_66 : f32 to vector<1x16xf32>
    %124 = arith.addf %123, %122 : vector<1x16xf32>
    %125 = arith.divf %123, %124 : vector<1x16xf32>
    %c0_67 = arith.constant 0 : index
    %c0_68 = arith.constant 0 : index
    %126 = vector.load %arg10[%c0_67, %c0_68] : memref<1x16xf32, #tpu.memory_space<vmem>>, vector<1x16xf32>
    tpu.vector_store %arg10[%c0_67, %c0_68], %125 {strides = array<i32>} : memref<1x16xf32, #tpu.memory_space<vmem>>, vector<1x16xf32>,
    return
  }
  func.func @transform_0(%arg0: i32) -> (i32, i32) {
    %c0_i32 = arith.constant 0 : i32
    %c0_i32_0 = arith.constant 0 : i32
    return %arg0, %c0_i32 : i32, i32
  }
  func.func @transform_1(%arg0: i32) -> (i32, i32) {
    %c0_i32 = arith.constant 0 : i32
    %c0_i32_0 = arith.constant 0 : i32
    %c0_i32_1 = arith.constant 0 : i32
    return %c0_i32, %c0_i32_0 : i32, i32
  }
  func.func @transform_2(%arg0: i32) -> (i32, i32) {
    %c0_i32 = arith.constant 0 : i32
    %c0_i32_0 = arith.constant 0 : i32
    %c0_i32_1 = arith.constant 0 : i32
    return %c0_i32, %c0_i32_0 : i32, i32
  }
  func.func @transform_3(%arg0: i32) -> (i32, i32, i32) {
    %c0_i32 = arith.constant 0 : i32
    %c0_i32_0 = arith.constant 0 : i32
    %c0_i32_1 = arith.constant 0 : i32
    %c0_i32_2 = arith.constant 0 : i32
    return %c0_i32, %c0_i32_0, %c0_i32_1 : i32, i32, i32
  }
  func.func @transform_4(%arg0: i32) -> (i32, i32, i32) {
    %c0_i32 = arith.constant 0 : i32
    %c0_i32_0 = arith.constant 0 : i32
    %c0_i32_1 = arith.constant 0 : i32
    %c0_i32_2 = arith.constant 0 : i32
    return %c0_i32, %c0_i32_0, %c0_i32_1 : i32, i32, i32
  }
  func.func @transform_5(%arg0: i32) -> (i32, i32, i32) {
    %c0_i32 = arith.constant 0 : i32
    %c0_i32_0 = arith.constant 0 : i32
    %c0_i32_1 = arith.constant 0 : i32
    %c0_i32_2 = arith.constant 0 : i32
    return %c0_i32, %c0_i32_0, %c0_i32_1 : i32, i32, i32
  }
  func.func @transform_6(%arg0: i32) -> (i32, i32, i32) {
    %c0_i32 = arith.constant 0 : i32
    %c0_i32_0 = arith.constant 0 : i32
    %c0_i32_1 = arith.constant 0 : i32
    %c0_i32_2 = arith.constant 0 : i32
    return %c0_i32, %c0_i32_0, %c0_i32_1 : i32, i32, i32
  }
  func.func @transform_7(%arg0: i32) -> (i32, i32) {
    %c0_i32 = arith.constant 0 : i32
    %c0_i32_0 = arith.constant 0 : i32
    %c0_i32_1 = arith.constant 0 : i32
    return %c0_i32, %c0_i32_0 : i32, i32
  }
  func.func @transform_8(%arg0: i32) -> (i32, i32) {
    %c0_i32 = arith.constant 0 : i32
    %c0_i32_0 = arith.constant 0 : i32
    %c0_i32_1 = arith.constant 0 : i32
    return %c0_i32, %c0_i32_0 : i32, i32
  }
  func.func @transform_9(%arg0: i32) -> (i32, i32) {
    %c0_i32 = arith.constant 0 : i32
    %c0_i32_0 = arith.constant 0 : i32
    return %c0_i32, %arg0 : i32, i32
  }
}

</mosaic_0001>

<llo_original>
// kernel: tpu_custom_call.1
$region0: #{tpu_custom_call.1}
  #allocation0 [shape = 'u32[]', space=smem, size = 0x4, offset = 0x4, fixed_abs, tag = 'smem constant byte address 0x4 - core index']
  #allocation1 [shape = 'u32[144,128]{1,0:T(1,128)}', space=vmem, size = 0x12000, scoped, tag = 'internal scratch']
  #allocation2 [shape = 'f32[1,1]{1,0:T(1,128)S(1)}', space=vmem, size = 0x200, scoped, tag = 'scoped memory for tpu_custom_call.1']
  %s0 = inlined_call_operand.hbm [shape: f32[16,128], index: 0, kind: input, shape index: {}]
  %s1 = inlined_call_operand.hbm [shape: f32[128,128], index: 1, kind: input, shape index: {}]
  %s2 = inlined_call_operand.vmem [shape: f32[1,128], index: 2, kind: input, shape index: {}]
  %s3 = inlined_call_operand.hbm [shape: f32[3,128,128], index: 3, kind: input, shape index: {}]
  %s4 = inlined_call_operand.vmem [shape: f32[3,1,128], index: 4, kind: input, shape index: {}]
  %s5 = inlined_call_operand.vmem [shape: f32[3,1,128], index: 5, kind: input, shape index: {}]
  %s6 = inlined_call_operand.vmem [shape: f32[3,1,128], index: 6, kind: input, shape index: {}]
  %s7 = inlined_call_operand.vmem [shape: f32[1,128], index: 7, kind: input, shape index: {}]
  %s8 = inlined_call_operand.<no memory space> [shape: f32[1,1], index: 8, kind: input, shape index: {}]
  %s9 = inlined_call_operand.hbm [shape: f32[1,16], index: 9, kind: output, shape index: {}]
  %s10 = sld [smem:[#allocation0]]
  $region58: #{tpu_custom_call.1} parent=0
    _
  %s12 = ssub.s32 1, %s10
  %s13 = scalar_select 0, %s12, %s10
  %v14 = vstv %s8
  %15 = vst [vmem:[#allocation2] sm:$0x1] %v14
  $region1: #{tpu_custom_call.1} parent=0
    #allocation3 [shape = 'u8[8192]{0}', space=vmem, size = 0x2000, scoped, tag = 'input window, operand 0, single buffered']
    #allocation4 [shape = 's32[1]{0}', space=sflag, size = 0x4, scoped, tag = 'scoped memory for tpu_custom_call.1']
    #allocation5 [shape = 's32[1]{0}', space=sflag, size = 0x4, scoped, tag = 'scoped memory for tpu_custom_call.1']
    #allocation6 [shape = 'u8[65536]{0}', space=vmem, size = 0x10000, scoped, tag = 'input window, operand 1, single buffered']
    #allocation7 [shape = 's32[1]{0}', space=sflag, size = 0x4, scoped, tag = 'scoped memory for tpu_custom_call.1']
    #allocation8 [shape = 'u8[196608]{0}', space=vmem, size = 0x30000, scoped, tag = 'input window, operand 3, single buffered']
    #allocation9 [shape = 'u8[512]{0}', space=vmem, size = 0x400, scoped, tag = 'output window, operand 0, single buffered']
    %16 = vsyncpa [#allocation4], 0
    %17 = vsyncpa [#allocation7], 0
    %18 = vsyncpa [#allocation5], 0
    // Predicated region
    $region2: #{tpu_custom_call.1} parent=1 // pred_check
      _
    $region3: #{tpu_custom_call.1} parent=1 // pred_check_branch
      %20 = sbr.rel (0) target = $region5
    $region4: #{tpu_custom_call.1} parent=1 // pred_region
      %s22 = ssub.s32 256, 256
      %23 = vsyncadd [#allocation4], %s22
      %s24 = sshll.u32 [#allocation3], 4
      %s25 = int_to_ptr.vmem [resolvable:$true] %s24
      %30 = dma.hbm_to_vmem [thread:$0]  %s0, 256, %s25, [#allocation4], 128, 128, 8
    $region5: #{tpu_custom_call.1} parent=1 // pred_fallthru
      _
    // Predicated region
    $region6: #{tpu_custom_call.1} parent=1 // pred_check
      _
    $region7: #{tpu_custom_call.1} parent=1 // pred_check_branch
      %32 = sbr.rel (0) target = $region9
    $region8: #{tpu_custom_call.1} parent=1 // pred_region
      %s34 = ssub.s32 2048, 2048
      %35 = vsyncadd [#allocation7], %s34
      %s36 = sshll.u32 [#allocation6], 4
      %s37 = int_to_ptr.vmem [resolvable:$true] %s36
      %42 = dma.hbm_to_vmem [thread:$0]  %s1, 2048, %s37, [#allocation7], 128, 128, 8
    $region9: #{tpu_custom_call.1} parent=1 // pred_fallthru
      _
    // Predicated region
    $region10: #{tpu_custom_call.1} parent=1 // pred_check
      _
    $region11: #{tpu_custom_call.1} parent=1 // pred_check_branch
      %44 = sbr.rel (0) target = $region13
    $region12: #{tpu_custom_call.1} parent=1 // pred_region
      _
    $region13: #{tpu_custom_call.1} parent=1 // pred_fallthru
      _
    // Predicated region
    $region14: #{tpu_custom_call.1} parent=1 // pred_check
      _
    $region15: #{tpu_custom_call.1} parent=1 // pred_check_branch
      %46 = sbr.rel (0) target = $region17
    $region16: #{tpu_custom_call.1} parent=1 // pred_region
      %s48 = ssub.s32 6144, 6144
      %49 = vsyncadd [#allocation7], %s48
      %s50 = sshll.u32 [#allocation8], 4
      %s51 = int_to_ptr.vmem [resolvable:$true] %s50
      %56 = dma.hbm_to_vmem [thread:$0]  %s3, 6144, %s51, [#allocation7], 128, 128, 8
    $region17: #{tpu_custom_call.1} parent=1 // pred_fallthru
      _
    // Predicated region
    $region18: #{tpu_custom_call.1} parent=1 // pred_check
      _
    $region19: #{tpu_custom_call.1} parent=1 // pred_check_branch
      %58 = sbr.rel (0) target = $region21
    $region20: #{tpu_custom_call.1} parent=1 // pred_region
      _
    $region21: #{tpu_custom_call.1} parent=1 // pred_fallthru
      _
    // Predicated region
    $region22: #{tpu_custom_call.1} parent=1 // pred_check
      _
    $region23: #{tpu_custom_call.1} parent=1 // pred_check_branch
      %60 = sbr.rel (0) target = $region25
    $region24: #{tpu_custom_call.1} parent=1 // pred_region
      _
    $region25: #{tpu_custom_call.1} parent=1 // pred_fallthru
      _
    // Predicated region
    $region26: #{tpu_custom_call.1} parent=1 // pred_check
      _
    $region27: #{tpu_custom_call.1} parent=1 // pred_check_branch
      %62 = sbr.rel (0) target = $region29
    $region28: #{tpu_custom_call.1} parent=1 // pred_region
      _
    $region29: #{tpu_custom_call.1} parent=1 // pred_fallthru
      _
    // Predicated region
    $region30: #{tpu_custom_call.1} parent=1 // pred_check
      _
    $region31: #{tpu_custom_call.1} parent=1 // pred_check_branch
      %64 = sbr.rel (0) target = $region33
    $region32: #{tpu_custom_call.1} parent=1 // pred_region
      _
    $region33: #{tpu_custom_call.1} parent=1 // pred_fallthru
      _
    // Predicated region
    $region34: #{tpu_custom_call.1} parent=1 // pred_check
      _
    $region35: #{tpu_custom_call.1} parent=1 // pred_check_branch
      %66 = sbr.rel (0) target = $region37
    $region36: #{tpu_custom_call.1} parent=1 // pred_region
      _
    $region37: #{tpu_custom_call.1} parent=1 // pred_fallthru
      _
    // Predicated region
    $region38: #{tpu_custom_call.1} parent=1 // pred_check
      _
    $region39: #{tpu_custom_call.1} parent=1 // pred_check_branch
      %68 = sbr.rel (0) target = $region41
    $region40: #{tpu_custom_call.1} parent=1 // pred_region
      %69 = dma.done [#allocation4], 256
    $region41: #{tpu_custom_call.1} parent=1 // pred_fallthru
      _
    // Predicated region
    $region42: #{tpu_custom_call.1} parent=1 // pred_check
      _
    $region43: #{tpu_custom_call.1} parent=1 // pred_check_branch
      %71 = sbr.rel (0) target = $region45
    $region44: #{tpu_custom_call.1} parent=1 // pred_region
      %72 = dma.done [#allocation7], 2048
    $region45: #{tpu_custom_call.1} parent=1 // pred_fallthru
      _
    // Predicated region
    $region46: #{tpu_custom_call.1} parent=1 // pred_check
      _
    $region47: #{tpu_custom_call.1} parent=1 // pred_check_branch
      %74 = sbr.rel (0) target = $region49
    $region48: #{tpu_custom_call.1} parent=1 // pred_region
      %75 = dma.done [#allocation7], 6144
    $region49: #{tpu_custom_call.1} parent=1 // pred_fallthru
      _
    %v76 = vld [vmem:[#allocation3] sm:$0xff]
    %v77 = vld [vmem:[#allocation3 + $0x8] sm:$0xff]
    %v78 = vld [vmem:[#allocation6] sm:$0xff]
    %v79 = vld [vmem:[#allocation6 + $0x8] sm:$0xff]
    %v80 = vld [vmem:[#allocation6 + $0x10] sm:$0xff]
    %v81 = vld [vmem:[#allocation6 + $0x18] sm:$0xff]
    %v82 = vld [vmem:[#allocation6 + $0x20] sm:$0xff]
    %v83 = vld [vmem:[#allocation6 + $0x28] sm:$0xff]
    %v84 = vld [vmem:[#allocation6 + $0x30] sm:$0xff]
    %v85 = vld [vmem:[#allocation6 + $0x38] sm:$0xff]
    %v86 = vld [vmem:[#allocation6 + $0x40] sm:$0xff]
    %v87 = vld [vmem:[#allocation6 + $0x48] sm:$0xff]
    %v88 = vld [vmem:[#allocation6 + $0x50] sm:$0xff]
    %v89 = vld [vmem:[#allocation6 + $0x58] sm:$0xff]
    %v90 = vld [vmem:[#allocation6 + $0x60] sm:$0xff]
    %v91 = vld [vmem:[#allocation6 + $0x68] sm:$0xff]
    %v92 = vld [vmem:[#allocation6 + $0x70] sm:$0xff]
    %v93 = vld [vmem:[#allocation6 + $0x78] sm:$0xff]
    %v94 = vld [vmem:[%s2] sm:$0x1]
    %v96 = vlaneseq
    %v97 = vshrl.u32 %v96, 7
    %v98 = vsub.s32 0, %v97
    %v99 = vrot.slane %v94, %v98
    %101 = vmatprep.subr.mxu0 0.0
    %102 = vmatpush1.msra.mxu0 %v78
    %103 = vmatprep.subr.mxu0 0.0
    %104 = vmatpush1.msra.mxu0 %v79
    %105 = vmatprep.subr.mxu0 0.0
    %106 = vmatpush1.msra.mxu0 %v80
    %107 = vmatprep.subr.mxu0 0.0
    %108 = vmatpush1.msra.mxu0 %v81
    %109 = vmatprep.subr.mxu0 0.0
    %110 = vmatpush1.msra.mxu0 %v82
    %111 = vmatprep.subr.mxu0 0.0
    %112 = vmatpush1.msra.mxu0 %v83
    %113 = vmatprep.subr.mxu0 0.0
    %114 = vmatpush1.msra.mxu0 %v84
    %115 = vmatprep.subr.mxu0 0.0
    %116 = vmatpush1.msra.mxu0 %v85
    %117 = vmatprep.subr.mxu0 0.0
    %118 = vmatpush1.msra.mxu0 %v86
    %119 = vmatprep.subr.mxu0 0.0
    %120 = vmatpush1.msra.mxu0 %v87
    %121 = vmatprep.subr.mxu0 0.0
    %122 = vmatpush1.msra.mxu0 %v88
    %123 = vmatprep.subr.mxu0 0.0
    %124 = vmatpush1.msra.mxu0 %v89
    %125 = vmatprep.subr.mxu0 0.0
    %126 = vmatpush1.msra.mxu0 %v90
    %127 = vmatprep.subr.mxu0 0.0
    %128 = vmatpush1.msra.mxu0 %v91
    %129 = vmatprep.subr.mxu0 0.0
    %130 = vmatpush1.msra.mxu0 %v92
    %131 = vmatprep.subr.mxu0 0.0
    %132 = vmatpush1.msra.mxu0 %v93
    %133 = vmatprep.subr.mxu0 0.0
    %134 = vmatpush1.msra.mxu0 0.0
    %135 = vmatprep.subr.mxu0 0.0
    %136 = vmatpush1.msra.mxu0 0.0
    %137 = vmatprep.subr.mxu0 0.0
    %138 = vmatpush1.msra.mxu0 0.0
    %139 = vmatprep.subr.mxu0 0.0
    %140 = vmatpush1.msra.mxu0 0.0
    %141 = vmatprep.subr.mxu0 0.0
    %142 = vmatpush1.msra.mxu0 0.0
    %143 = vmatprep.subr.mxu0 0.0
    %144 = vmatpush1.msra.mxu0 0.0
    %145 = vmatprep.subr.mxu0 0.0
    %146 = vmatpush1.msra.mxu0 0.0
    %147 = vmatprep.subr.mxu0 0.0
    %148 = vmatpush1.msra.mxu0 0.0
    %149 = vmatprep.subr.mxu0 0.0
    %150 = vmatpush1.msra.mxu0 0.0
    %151 = vmatprep.subr.mxu0 0.0
    %152 = vmatpush1.msra.mxu0 0.0
    %153 = vmatprep.subr.mxu0 0.0
    %154 = vmatpush1.msra.mxu0 0.0
    %155 = vmatprep.subr.mxu0 0.0
    %156 = vmatpush1.msra.mxu0 0.0
    %157 = vmatprep.subr.mxu0 0.0
    %158 = vmatpush1.msra.mxu0 0.0
    %159 = vmatprep.subr.mxu0 0.0
    %160 = vmatpush1.msra.mxu0 0.0
    %161 = vmatprep.subr.mxu0 0.0
    %162 = vmatpush1.msra.mxu0 0.0
    %163 = vmatprep.subr.mxu0 0.0
    %164 = vmatpush1.msra.mxu0 0.0
    %165 = vmatprep.mubr.f32.mxu0 0.0
    %166 = vmatmul.mubr.f32.gmra.mrb[0].mxu0 %v76
    %v167 = vpop.f32.mrb[0].mxu0
    %v168 = vadd.f32 %v99, %v167
    %v169 = vpop.f32.mrb[0].mxu0
    %170 = vmatprep.mubr.f32.mxu0 0.0
    %171 = vmatmul.mubr.f32.gmra.mrb[0].mxu0 %v77
    %v172 = vpop.f32.mrb[0].mxu0
    %v173 = vadd.f32 %v99, %v172
    %v174 = vpop.f32.mrb[0].mxu0
    %175 = vdwg.mxu0
    %v176 = vmax.f32 %v168, 0.0
    %v177 = vmax.f32 %v173, 0.0
    %v178 = vld [vmem:[#allocation8] sm:$0xff]
    %v179 = vld [vmem:[#allocation8 + $0x8] sm:$0xff]
    %v180 = vld [vmem:[#allocation8 + $0x10] sm:$0xff]
    %v181 = vld [vmem:[#allocation8 + $0x18] sm:$0xff]
    %v182 = vld [vmem:[#allocation8 + $0x20] sm:$0xff]
    %v183 = vld [vmem:[#allocation8 + $0x28] sm:$0xff]
    %v184 = vld [vmem:[#allocation8 + $0x30] sm:$0xff]
    %v185 = vld [vmem:[#allocation8 + $0x38] sm:$0xff]
    %v186 = vld [vmem:[#allocation8 + $0x40] sm:$0xff]
    %v187 = vld [vmem:[#allocation8 + $0x48] sm:$0xff]
    %v188 = vld [vmem:[#allocation8 + $0x50] sm:$0xff]
    %v189 = vld [vmem:[#allocation8 + $0x58] sm:$0xff]
    %v190 = vld [vmem:[#allocation8 + $0x60] sm:$0xff]
    %v191 = vld [vmem:[#allocation8 + $0x68] sm:$0xff]
    %v192 = vld [vmem:[#allocation8 + $0x70] sm:$0xff]
    %v193 = vld [vmem:[#allocation8 + $0x78] sm:$0xff]
    %v194 = vld [vmem:[%s4] sm:$0x1]
    %v196 = vlaneseq
    %v197 = vshrl.u32 %v196, 7
    %v198 = vsub.s32 0, %v197
    %v199 = vrot.slane %v194, %v198
    %201 = vmatprep.subr.mxu0 0.0
    %202 = vmatpush1.msra.mxu0 %v178
    %203 = vmatprep.subr.mxu0 0.0
    %204 = vmatpush1.msra.mxu0 %v179
    %205 = vmatprep.subr.mxu0 0.0
    %206 = vmatpush1.msra.mxu0 %v180
    %207 = vmatprep.subr.mxu0 0.0
    %208 = vmatpush1.msra.mxu0 %v181
    %209 = vmatprep.subr.mxu0 0.0
    %210 = vmatpush1.msra.mxu0 %v182
    %211 = vmatprep.subr.mxu0 0.0
    %212 = vmatpush1.msra.mxu0 %v183
    %213 = vmatprep.subr.mxu0 0.0
    %214 = vmatpush1.msra.mxu0 %v184
    %215 = vmatprep.subr.mxu0 0.0
    %216 = vmatpush1.msra.mxu0 %v185
    %217 = vmatprep.subr.mxu0 0.0
    %218 = vmatpush1.msra.mxu0 %v186
    %219 = vmatprep.subr.mxu0 0.0
    %220 = vmatpush1.msra.mxu0 %v187
    %221 = vmatprep.subr.mxu0 0.0
    %222 = vmatpush1.msra.mxu0 %v188
    %223 = vmatprep.subr.mxu0 0.0
    %224 = vmatpush1.msra.mxu0 %v189
    %225 = vmatprep.subr.mxu0 0.0
    %226 = vmatpush1.msra.mxu0 %v190
    %227 = vmatprep.subr.mxu0 0.0
    %228 = vmatpush1.msra.mxu0 %v191
    %229 = vmatprep.subr.mxu0 0.0
    %230 = vmatpush1.msra.mxu0 %v192
    %231 = vmatprep.subr.mxu0 0.0
    %232 = vmatpush1.msra.mxu0 %v193
    %233 = vmatprep.subr.mxu0 0.0
    %234 = vmatpush1.msra.mxu0 0.0
    %235 = vmatprep.subr.mxu0 0.0
    %236 = vmatpush1.msra.mxu0 0.0
    %237 = vmatprep.subr.mxu0 0.0
    %238 = vmatpush1.msra.mxu0 0.0
    %239 = vmatprep.subr.mxu0 0.0
    %240 = vmatpush1.msra.mxu0 0.0
    %241 = vmatprep.subr.mxu0 0.0
    %242 = vmatpush1.msra.mxu0 0.0
    %243 = vmatprep.subr.mxu0 0.0
    %244 = vmatpush1.msra.mxu0 0.0
    %245 = vmatprep.subr.mxu0 0.0
    %246 = vmatpush1.msra.mxu0 0.0
    %247 = vmatprep.subr.mxu0 0.0
    %248 = vmatpush1.msra.mxu0 0.0
    %249 = vmatprep.subr.mxu0 0.0
    %250 = vmatpush1.msra.mxu0 0.0
    %251 = vmatprep.subr.mxu0 0.0
    %252 = vmatpush1.msra.mxu0 0.0
    %253 = vmatprep.subr.mxu0 0.0
    %254 = vmatpush1.msra.mxu0 0.0
    %255 = vmatprep.subr.mxu0 0.0
    %256 = vmatpush1.msra.mxu0 0.0
    %257 = vmatprep.subr.mxu0 0.0
    %258 = vmatpush1.msra.mxu0 0.0
    %259 = vmatprep.subr.mxu0 0.0
    %260 = vmatpush1.msra.mxu0 0.0
    %261 = vmatprep.subr.mxu0 0.0
    %262 = vmatpush1.msra.mxu0 0.0
    %263 = vmatprep.subr.mxu0 0.0
    %264 = vmatpush1.msra.mxu0 0.0
    %265 = vmatprep.mubr.f32.mxu0 0.0
    %266 = vmatmul.mubr.f32.gmra.mrb[0].mxu0 %v176
    %v267 = vpop.f32.mrb[0].mxu0
    %v268 = vadd.f32 %v199, %v267
    %v269 = vpop.f32.mrb[0].mxu0
    %270 = vmatprep.mubr.f32.mxu0 0.0
    %271 = vmatmul.mubr.f32.gmra.mrb[0].mxu0 %v177
    %v272 = vpop.f32.mrb[0].mxu0
    %v273 = vadd.f32 %v199, %v272
    %v274 = vpop.f32.mrb[0].mxu0
    %275 = vdwg.mxu0
    %v276 = vmax.f32 %v268, 0.0
    %v277 = vmax.f32 %v273, 0.0
    %278 = vadd.xlane.f32.xlu0 %v276
    %v279 = vpop.xlane.xlu0 %278
    %280 = vadd.xlane.f32.xlu0 %v277
    %v281 = vpop.xlane.xlu0 %280
    %v282 = vmul.f32 %v279, 0.0078125
    %v283 = vmul.f32 %v281, 0.0078125
    %v284 = vmul.f32 %v276, %v276
    %v285 = vmul.f32 %v277, %v277
    %286 = vadd.xlane.f32.xlu0 %v284
    %v287 = vpop.xlane.xlu0 %286
    %288 = vadd.xlane.f32.xlu0 %v285
    %v289 = vpop.xlane.xlu0 %288
    %v290 = vmul.f32 %v287, 0.0078125
    %v291 = vmul.f32 %v289, 0.0078125
    %v292 = vmul.f32 %v282, %v282
    %v293 = vmul.f32 %v283, %v283
    %v294 = vsub.f32 %v290, %v292
    %v295 = vsub.f32 %v291, %v293
    %v296 = vsub.f32 %v276, %v282
    %v297 = vsub.f32 %v277, %v283
    %v298 = vadd.f32 %v294, 1e-05
    %v299 = vadd.f32 %v295, 1e-05
    %v300 = vrsqrt.pop %v298
    %v301 = vrsqrt.pop %v299
    %v302 = vmul.f32 %v296, %v300
    %v303 = vmul.f32 %v297, %v301
    %v304 = vld [vmem:[%s5] sm:$0x1]
    %v306 = vlaneseq
    %v307 = vshrl.u32 %v306, 7
    %v308 = vsub.s32 0, %v307
    %v309 = vrot.slane %v304, %v308
    %v311 = vmul.f32 %v302, %v309
    %v312 = vmul.f32 %v303, %v309
    %v313 = vld [vmem:[%s6] sm:$0x1]
    %v315 = vlaneseq
    %v316 = vshrl.u32 %v315, 7
    %v317 = vsub.s32 0, %v316
    %v318 = vrot.slane %v313, %v317
    %v320 = vadd.f32 %v311, %v318
    %v321 = vadd.f32 %v312, %v318
    %v322 = vadd.f32 %v320, %v176
    %v323 = vadd.f32 %v321, %v177
    %s324 = scalar_lea.vmem [#allocation8], 128
    %v325 = vld [vmem:[%s324] sm:$0xff]
    %v326 = vld [vmem:[%s324 + $0x8] sm:$0xff]
    %v327 = vld [vmem:[%s324 + $0x10] sm:$0xff]
    %v328 = vld [vmem:[%s324 + $0x18] sm:$0xff]
    %v329 = vld [vmem:[%s324 + $0x20] sm:$0xff]
    %v330 = vld [vmem:[%s324 + $0x28] sm:$0xff]
    %v331 = vld [vmem:[%s324 + $0x30] sm:$0xff]
    %v332 = vld [vmem:[%s324 + $0x38] sm:$0xff]
    %v333 = vld [vmem:[%s324 + $0x40] sm:$0xff]
    %v334 = vld [vmem:[%s324 + $0x48] sm:$0xff]
    %v335 = vld [vmem:[%s324 + $0x50] sm:$0xff]
    %v336 = vld [vmem:[%s324 + $0x58] sm:$0xff]
    %v337 = vld [vmem:[%s324 + $0x60] sm:$0xff]
    %v338 = vld [vmem:[%s324 + $0x68] sm:$0xff]
    %v339 = vld [vmem:[%s324 + $0x70] sm:$0xff]
    %v340 = vld [vmem:[%s324 + $0x78] sm:$0xff]
    %s341 = scalar_lea.vmem %s4, 1
    %v342 = vld [vmem:[%s341] sm:$0x1]
    %v344 = vlaneseq
    %v345 = vshrl.u32 %v344, 7
    %v346 = vsub.s32 0, %v345
    %v347 = vrot.slane %v342, %v346
    %349 = vmatprep.subr.mxu0 0.0
    %350 = vmatpush1.msra.mxu0 %v325
    %351 = vmatprep.subr.mxu0 0.0
    %352 = vmatpush1.msra.mxu0 %v326
    %353 = vmatprep.subr.mxu0 0.0
    %354 = vmatpush1.msra.mxu0 %v327
    %355 = vmatprep.subr.mxu0 0.0
    %356 = vmatpush1.msra.mxu0 %v328
    %357 = vmatprep.subr.mxu0 0.0
    %358 = vmatpush1.msra.mxu0 %v329
    %359 = vmatprep.subr.mxu0 0.0
    %360 = vmatpush1.msra.mxu0 %v330
    %361 = vmatprep.subr.mxu0 0.0
    %362 = vmatpush1.msra.mxu0 %v331
    %363 = vmatprep.subr.mxu0 0.0
    %364 = vmatpush1.msra.mxu0 %v332
    %365 = vmatprep.subr.mxu0 0.0
    %366 = vmatpush1.msra.mxu0 %v333
    %367 = vmatprep.subr.mxu0 0.0
    %368 = vmatpush1.msra.mxu0 %v334
    %369 = vmatprep.subr.mxu0 0.0
    %370 = vmatpush1.msra.mxu0 %v335
    %371 = vmatprep.subr.mxu0 0.0
    %372 = vmatpush1.msra.mxu0 %v336
    %373 = vmatprep.subr.mxu0 0.0
    %374 = vmatpush1.msra.mxu0 %v337
    %375 = vmatprep.subr.mxu0 0.0
    %376 = vmatpush1.msra.mxu0 %v338
    %377 = vmatprep.subr.mxu0 0.0
    %378 = vmatpush1.msra.mxu0 %v339
    %379 = vmatprep.subr.mxu0 0.0
    %380 = vmatpush1.msra.mxu0 %v340
    %381 = vmatprep.subr.mxu0 0.0
    %382 = vmatpush1.msra.mxu0 0.0
    %383 = vmatprep.subr.mxu0 0.0
    %384 = vmatpush1.msra.mxu0 0.0
    %385 = vmatprep.subr.mxu0 0.0
    %386 = vmatpush1.msra.mxu0 0.0
    %387 = vmatprep.subr.mxu0 0.0
    %388 = vmatpush1.msra.mxu0 0.0
    %389 = vmatprep.subr.mxu0 0.0
    %390 = vmatpush1.msra.mxu0 0.0
    %391 = vmatprep.subr.mxu0 0.0
    %392 = vmatpush1.msra.mxu0 0.0
    %393 = vmatprep.subr.mxu0 0.0
    %394 = vmatpush1.msra.mxu0 0.0
    %395 = vmatprep.subr.mxu0 0.0
    %396 = vmatpush1.msra.mxu0 0.0
    %397 = vmatprep.subr.mxu0 0.0
    %398 = vmatpush1.msra.mxu0 0.0
    %399 = vmatprep.subr.mxu0 0.0
    %400 = vmatpush1.msra.mxu0 0.0
    %401 = vmatprep.subr.mxu0 0.0
    %402 = vmatpush1.msra.mxu0 0.0
    %403 = vmatprep.subr.mxu0 0.0
    %404 = vmatpush1.msra.mxu0 0.0
    %405 = vmatprep.subr.mxu0 0.0
    %406 = vmatpush1.msra.mxu0 0.0
    %407 = vmatprep.subr.mxu0 0.0
    %408 = vmatpush1.msra.mxu0 0.0
    %409 = vmatprep.subr.mxu0 0.0
    %410 = vmatpush1.msra.mxu0 0.0
    %411 = vmatprep.subr.mxu0 0.0
    %412 = vmatpush1.msra.mxu0 0.0
    %413 = vmatprep.mubr.f32.mxu0 0.0
    %414 = vmatmul.mubr.f32.gmra.mrb[0].mxu0 %v322
    %v415 = vpop.f32.mrb[0].mxu0
    %v416 = vadd.f32 %v347, %v415
    %v417 = vpop.f32.mrb[0].mxu0
    %418 = vmatprep.mubr.f32.mxu0 0.0
    %419 = vmatmul.mubr.f32.gmra.mrb[0].mxu0 %v323
    %v420 = vpop.f32.mrb[0].mxu0
    %v421 = vadd.f32 %v347, %v420
    %v422 = vpop.f32.mrb[0].mxu0
    %423 = vdwg.mxu0
    %v424 = vmax.f32 %v416, 0.0
    %v425 = vmax.f32 %v421, 0.0
    %426 = vadd.xlane.f32.xlu0 %v424
    %v427 = vpop.xlane.xlu0 %426
    %428 = vadd.xlane.f32.xlu0 %v425
    %v429 = vpop.xlane.xlu0 %428
    %v430 = vmul.f32 %v427, 0.0078125
    %v431 = vmul.f32 %v429, 0.0078125
    %v432 = vmul.f32 %v424, %v424
    %v433 = vmul.f32 %v425, %v425
    %434 = vadd.xlane.f32.xlu0 %v432
    %v435 = vpop.xlane.xlu0 %434
    %436 = vadd.xlane.f32.xlu0 %v433
    %v437 = vpop.xlane.xlu0 %436
    %v438 = vmul.f32 %v435, 0.0078125
    %v439 = vmul.f32 %v437, 0.0078125
    %v440 = vmul.f32 %v430, %v430
    %v441 = vmul.f32 %v431, %v431
    %v442 = vsub.f32 %v438, %v440
    %v443 = vsub.f32 %v439, %v441
    %v444 = vsub.f32 %v424, %v430
    %v445 = vsub.f32 %v425, %v431
    %v446 = vadd.f32 %v442, 1e-05
    %v447 = vadd.f32 %v443, 1e-05
    %v448 = vrsqrt.pop %v446
    %v449 = vrsqrt.pop %v447
    %v450 = vmul.f32 %v444, %v448
    %v451 = vmul.f32 %v445, %v449
    %s452 = scalar_lea.vmem %s5, 1
    %v453 = vld [vmem:[%s452] sm:$0x1]
    %v455 = vlaneseq
    %v456 = vshrl.u32 %v455, 7
    %v457 = vsub.s32 0, %v456
    %v458 = vrot.slane %v453, %v457
    %v460 = vmul.f32 %v450, %v458
    %v461 = vmul.f32 %v451, %v458
    %s462 = scalar_lea.vmem %s6, 1
    %v463 = vld [vmem:[%s462] sm:$0x1]
    %v465 = vlaneseq
    %v466 = vshrl.u32 %v465, 7
    %v467 = vsub.s32 0, %v466
    %v468 = vrot.slane %v463, %v467
    %v470 = vadd.f32 %v460, %v468
    %v471 = vadd.f32 %v461, %v468
    %v472 = vadd.f32 %v470, %v322
    %v473 = vadd.f32 %v471, %v323
    %s474 = scalar_lea.vmem [#allocation8], 256
    %v475 = vld [vmem:[%s474] sm:$0xff]
    %v476 = vld [vmem:[%s474 + $0x8] sm:$0xff]
    %v477 = vld [vmem:[%s474 + $0x10] sm:$0xff]
    %v478 = vld [vmem:[%s474 + $0x18] sm:$0xff]
    %v479 = vld [vmem:[%s474 + $0x20] sm:$0xff]
    %v480 = vld [vmem:[%s474 + $0x28] sm:$0xff]
    %v481 = vld [vmem:[%s474 + $0x30] sm:$0xff]
    %v482 = vld [vmem:[%s474 + $0x38] sm:$0xff]
    %v483 = vld [vmem:[%s474 + $0x40] sm:$0xff]
    %v484 = vld [vmem:[%s474 + $0x48] sm:$0xff]
    %v485 = vld [vmem:[%s474 + $0x50] sm:$0xff]
    %v486 = vld [vmem:[%s474 + $0x58] sm:$0xff]
    %v487 = vld [vmem:[%s474 + $0x60] sm:$0xff]
    %v488 = vld [vmem:[%s474 + $0x68] sm:$0xff]
    %v489 = vld [vmem:[%s474 + $0x70] sm:$0xff]
    %v490 = vld [vmem:[%s474 + $0x78] sm:$0xff]
    %s491 = scalar_lea.vmem %s4, 2
    %v492 = vld [vmem:[%s491] sm:$0x1]
    %v494 = vlaneseq
    %v495 = vshrl.u32 %v494, 7
    %v496 = vsub.s32 0, %v495
    %v497 = vrot.slane %v492, %v496
    %499 = vmatprep.subr.mxu0 0.0
    %500 = vmatpush1.msra.mxu0 %v475
    %501 = vmatprep.subr.mxu0 0.0
    %502 = vmatpush1.msra.mxu0 %v476
    %503 = vmatprep.subr.mxu0 0.0
    %504 = vmatpush1.msra.mxu0 %v477
    %505 = vmatprep.subr.mxu0 0.0
    %506 = vmatpush1.msra.mxu0 %v478
    %507 = vmatprep.subr.mxu0 0.0
    %508 = vmatpush1.msra.mxu0 %v479
    %509 = vmatprep.subr.mxu0 0.0
    %510 = vmatpush1.msra.mxu0 %v480
    %511 = vmatprep.subr.mxu0 0.0
    %512 = vmatpush1.msra.mxu0 %v481
    %513 = vmatprep.subr.mxu0 0.0
    %514 = vmatpush1.msra.mxu0 %v482
    %515 = vmatprep.subr.mxu0 0.0
    %516 = vmatpush1.msra.mxu0 %v483
    %517 = vmatprep.subr.mxu0 0.0
    %518 = vmatpush1.msra.mxu0 %v484
    %519 = vmatprep.subr.mxu0 0.0
    %520 = vmatpush1.msra.mxu0 %v485
    %521 = vmatprep.subr.mxu0 0.0
    %522 = vmatpush1.msra.mxu0 %v486
    %523 = vmatprep.subr.mxu0 0.0
    %524 = vmatpush1.msra.mxu0 %v487
    %525 = vmatprep.subr.mxu0 0.0
    %526 = vmatpush1.msra.mxu0 %v488
    %527 = vmatprep.subr.mxu0 0.0
    %528 = vmatpush1.msra.mxu0 %v489
    %529 = vmatprep.subr.mxu0 0.0
    %530 = vmatpush1.msra.mxu0 %v490
    %531 = vmatprep.subr.mxu0 0.0
    %532 = vmatpush1.msra.mxu0 0.0
    %533 = vmatprep.subr.mxu0 0.0
    %534 = vmatpush1.msra.mxu0 0.0
    %535 = vmatprep.subr.mxu0 0.0
    %536 = vmatpush1.msra.mxu0 0.0
    %537 = vmatprep.subr.mxu0 0.0
    %538 = vmatpush1.msra.mxu0 0.0
    %539 = vmatprep.subr.mxu0 0.0
    %540 = vmatpush1.msra.mxu0 0.0
    %541 = vmatprep.subr.mxu0 0.0
    %542 = vmatpush1.msra.mxu0 0.0
    %543 = vmatprep.subr.mxu0 0.0
    %544 = vmatpush1.msra.mxu0 0.0
    %545 = vmatprep.subr.mxu0 0.0
    %546 = vmatpush1.msra.mxu0 0.0
    %547 = vmatprep.subr.mxu0 0.0
    %548 = vmatpush1.msra.mxu0 0.0
    %549 = vmatprep.subr.mxu0 0.0
    %550 = vmatpush1.msra.mxu0 0.0
    %551 = vmatprep.subr.mxu0 0.0
    %552 = vmatpush1.msra.mxu0 0.0
    %553 = vmatprep.subr.mxu0 0.0
    %554 = vmatpush1.msra.mxu0 0.0
    %555 = vmatprep.subr.mxu0 0.0
    %556 = vmatpush1.msra.mxu0 0.0
    %557 = vmatprep.subr.mxu0 0.0
    %558 = vmatpush1.msra.mxu0 0.0
    %559 = vmatprep.subr.mxu0 0.0
    %560 = vmatpush1.msra.mxu0 0.0
    %561 = vmatprep.subr.mxu0 0.0
    %562 = vmatpush1.msra.mxu0 0.0
    %563 = vmatprep.mubr.f32.mxu0 0.0
    %564 = vmatmul.mubr.f32.gmra.mrb[0].mxu0 %v472
    %v565 = vpop.f32.mrb[0].mxu0
    %v566 = vadd.f32 %v497, %v565
    %v567 = vpop.f32.mrb[0].mxu0
    %568 = vmatprep.mubr.f32.mxu0 0.0
    %569 = vmatmul.mubr.f32.gmra.mrb[0].mxu0 %v473
    %v570 = vpop.f32.mrb[0].mxu0
    %v571 = vadd.f32 %v497, %v570
    %v572 = vpop.f32.mrb[0].mxu0
    %573 = vdwg.mxu0
    %v574 = vmax.f32 %v566, 0.0
    %v575 = vmax.f32 %v571, 0.0
    %576 = vadd.xlane.f32.xlu0 %v574
    %v577 = vpop.xlane.xlu0 %576
    %578 = vadd.xlane.f32.xlu0 %v575
    %v579 = vpop.xlane.xlu0 %578
    %v580 = vmul.f32 %v577, 0.0078125
    %v581 = vmul.f32 %v579, 0.0078125
    %v582 = vmul.f32 %v574, %v574
    %v583 = vmul.f32 %v575, %v575
    %584 = vadd.xlane.f32.xlu0 %v582
    %v585 = vpop.xlane.xlu0 %584
    %586 = vadd.xlane.f32.xlu0 %v583
    %v587 = vpop.xlane.xlu0 %586
    %v588 = vmul.f32 %v585, 0.0078125
    %v589 = vmul.f32 %v587, 0.0078125
    %v590 = vmul.f32 %v580, %v580
    %v591 = vmul.f32 %v581, %v581
    %v592 = vsub.f32 %v588, %v590
    %v593 = vsub.f32 %v589, %v591
    %v594 = vsub.f32 %v574, %v580
    %v595 = vsub.f32 %v575, %v581
    %v596 = vadd.f32 %v592, 1e-05
    %v597 = vadd.f32 %v593, 1e-05
    %v598 = vrsqrt.pop %v596
    %v599 = vrsqrt.pop %v597
    %v600 = vmul.f32 %v594, %v598
    %v601 = vmul.f32 %v595, %v599
    %s602 = scalar_lea.vmem %s5, 2
    %v603 = vld [vmem:[%s602] sm:$0x1]
    %v605 = vlaneseq
    %v606 = vshrl.u32 %v605, 7
    %v607 = vsub.s32 0, %v606
    %v608 = vrot.slane %v603, %v607
    %v610 = vmul.f32 %v600, %v608
    %v611 = vmul.f32 %v601, %v608
    %s612 = scalar_lea.vmem %s6, 2
    %v613 = vld [vmem:[%s612] sm:$0x1]
    %v615 = vlaneseq
    %v616 = vshrl.u32 %v615, 7
    %v617 = vsub.s32 0, %v616
    %v618 = vrot.slane %v613, %v617
    %v620 = vadd.f32 %v610, %v618
    %v621 = vadd.f32 %v611, %v618
    %v622 = vadd.f32 %v620, %v472
    %v623 = vadd.f32 %v621, %v473
    %v624 = vld [vmem:[%s7] sm:$0x1]
    %v625 = vld [vmem:[#allocation2] sm:$0x1]
    %627 = vset.pattern.permute.xlu0 0
    %628 = vperm.xlu0 %627, %v625
    %v629 = vpop.permute.xlu0 %628
    %v631 = vlaneseq
    %v632 = vshrl.u32 %v631, 7
    %v633 = vsub.s32 0, %v632
    %v634 = vrot.slane %v629, %v633
    %635 = vmatprep.subr.mxu0 0.0
    %636 = vmatpush1.xpose.msra.mxu0 %v622
    %637 = vmatprep.subr.mxu0 0.0
    %638 = vmatpush1.xpose.msra.mxu0 %v623
    %639 = vmatprep.subr.mxu0 0.0
    %640 = vmatpush1.xpose.msra.mxu0 0.0
    %641 = vmatprep.subr.mxu0 0.0
    %642 = vmatpush1.xpose.msra.mxu0 0.0
    %643 = vmatprep.subr.mxu0 0.0
    %644 = vmatpush1.xpose.msra.mxu0 0.0
    %645 = vmatprep.subr.mxu0 0.0
    %646 = vmatpush1.xpose.msra.mxu0 0.0
    %647 = vmatprep.subr.mxu0 0.0
    %648 = vmatpush1.xpose.msra.mxu0 0.0
    %649 = vmatprep.subr.mxu0 0.0
    %650 = vmatpush1.xpose.msra.mxu0 0.0
    %651 = vmatprep.subr.mxu0 0.0
    %652 = vmatpush1.xpose.msra.mxu0 0.0
    %653 = vmatprep.subr.mxu0 0.0
    %654 = vmatpush1.xpose.msra.mxu0 0.0
    %655 = vmatprep.subr.mxu0 0.0
    %656 = vmatpush1.xpose.msra.mxu0 0.0
    %657 = vmatprep.subr.mxu0 0.0
    %658 = vmatpush1.xpose.msra.mxu0 0.0
    %659 = vmatprep.subr.mxu0 0.0
    %660 = vmatpush1.xpose.msra.mxu0 0.0
    %661 = vmatprep.subr.mxu0 0.0
    %662 = vmatpush1.xpose.msra.mxu0 0.0
    %663 = vmatprep.subr.mxu0 0.0
    %664 = vmatpush1.xpose.msra.mxu0 0.0
    %665 = vmatprep.subr.mxu0 0.0
    %666 = vmatpush1.xpose.msra.mxu0 0.0
    %667 = vmatprep.subr.mxu0 0.0
    %668 = vmatpush1.xpose.msra.mxu0 0.0
    %669 = vmatprep.subr.mxu0 0.0
    %670 = vmatpush1.xpose.msra.mxu0 0.0
    %671 = vmatprep.subr.mxu0 0.0
    %672 = vmatpush1.xpose.msra.mxu0 0.0
    %673 = vmatprep.subr.mxu0 0.0
    %674 = vmatpush1.xpose.msra.mxu0 0.0
    %675 = vmatprep.subr.mxu0 0.0
    %676 = vmatpush1.xpose.msra.mxu0 0.0
    %677 = vmatprep.subr.mxu0 0.0
    %678 = vmatpush1.xpose.msra.mxu0 0.0
    %679 = vmatprep.subr.mxu0 0.0
    %680 = vmatpush1.xpose.msra.mxu0 0.0
    %681 = vmatprep.subr.mxu0 0.0
    %682 = vmatpush1.xpose.msra.mxu0 0.0
    %683 = vmatprep.subr.mxu0 0.0
    %684 = vmatpush1.xpose.msra.mxu0 0.0
    %685 = vmatprep.subr.mxu0 0.0
    %686 = vmatpush1.xpose.msra.mxu0 0.0
    %687 = vmatprep.subr.mxu0 0.0
    %688 = vmatpush1.xpose.msra.mxu0 0.0
    %689 = vmatprep.subr.mxu0 0.0
    %690 = vmatpush1.xpose.msra.mxu0 0.0
    %691 = vmatprep.subr.mxu0 0.0
    %692 = vmatpush1.xpose.msra.mxu0 0.0
    %693 = vmatprep.subr.mxu0 0.0
    %694 = vmatpush1.xpose.msra.mxu0 0.0
    %695 = vmatprep.subr.mxu0 0.0
    %696 = vmatpush1.xpose.msra.mxu0 0.0
    %697 = vmatprep.subr.mxu0 0.0
    %698 = vmatpush1.xpose.msra.mxu0 0.0
    %699 = vmatprep.mubr.f32.mxu0 0.0
    %700 = vmatmul.mubr.f32.gmra.mrb[0].mxu0 %v624
    %v701 = vpop.f32.mrb[0].mxu0
    %v702 = vadd.f32 %v634, %v701
    %v703 = vpop.f32.mrb[0].mxu0
    %704 = vdwg.mxu0
    %v705 = vxor.u32 %v702, 2147483648
    %v706 = vmul.f32 %v705, 1.442695
    %v707 = vpow.pop %v706
    %v708 = vadd.f32 %v707, 1.0
    %v709 = vrcp.pop %v708
    %v710 = vmul.f32 1.0, %v709
    %vm711 = vcmask 122880
    %712 = vst.msk [vmem:[#allocation9] sm:$0x1] %vm711, %v710
    // Predicated region
    $region50: #{tpu_custom_call.1} parent=1 // pred_check
      _
    $region51: #{tpu_custom_call.1} parent=1 // pred_check_branch
      %714 = sbr.rel (0) target = $region53
    $region52: #{tpu_custom_call.1} parent=1 // pred_region
      %s716 = ssub.s32 16, 16
      %717 = vsyncadd [#allocation5], %s716
      %s719 = sshll.u32 [#allocation9], 4
      %s720 = int_to_ptr.vmem [resolvable:$true] %s719
      %722 = dma.vmem_to_hbm [thread:$0]  %s720, 16, %s9, [#allocation5]
    $region53: #{tpu_custom_call.1} parent=1 // pred_fallthru
      _
    // Predicated region
    $region54: #{tpu_custom_call.1} parent=1 // pred_check
      _
    $region55: #{tpu_custom_call.1} parent=1 // pred_check_branch
      %724 = sbr.rel (0) target = $region57
    $region56: #{tpu_custom_call.1} parent=1 // pred_region
      %725 = dma.done [#allocation5], 16
    $region57: #{tpu_custom_call.1} parent=1 // pred_fallthru
      _
    %726 = vsyncpa [#allocation4], 1
    %727 = vsyncpa [#allocation7], 1
    %728 = vsyncpa [#allocation5], 1

</llo_original>
